<compile_context>
chip_gen: v6e
topology: v6e:2x2x1
jax: 0.10.0
libtpu: 0.0.40
codegen_flags: <defaults>
</compile_context>

<pallas_src>
import jax
import jax.numpy as jnp
import numpy as np
from jax.experimental import pallas as pl
from jax.experimental.pallas import tpu as pltpu


def _rbf_kernel(gamma_ref, x_ref, c_ref, o_ref):
    # gamma_ref: (1, 1) f32 runtime scalar
    # x_ref:     (1, 1, T) f32, lane-dense inputs for this row tile
    # c_ref:     (1, K) f32 centers
    # o_ref:     (T, K) out_dtype
    neg_gamma = -gamma_ref[...]                       # (1, 1), broadcasts below
    x_row = x_ref[0]                                  # (1, T), rows live in lanes
    t = x_row.shape[-1]
    # Lane -> sublane redistribution.  Broadcast to a fully (8,128)-aligned
    # (8, T) slab (cheap sublane broadcast) so the XLU transpose operates on
    # an aligned operand, then keep a single column.  The XLU is otherwise
    # idle in this kernel, so this hides under the output store stream.
    x_col = jnp.transpose(jnp.broadcast_to(x_row, (8, t)), (1, 0))[:, 0:1]  # (T, 1)
    d = x_col - c_ref[...]                            # (T, K)
    o_ref[...] = jnp.exp((d * d) * neg_gamma).astype(o_ref.dtype)


def _vmem_capacity_bytes():
    """Physical VMEM of the attached TPU (conservative 64 MiB fallback)."""
    try:
        return int(getattr(pltpu.get_tpu_info(), "vmem_capacity_bytes", 64 << 20))
    except Exception:  # pragma: no cover - e.g. query unsupported
        return 64 << 20


def _choose_row_tile(n, k, out_itemsize, vmem_budget_bytes, max_rows):
    """Largest row tile (multiple of 128, <= max_rows) fitting the budget.

    Per-row VMEM: double-buffered output block (out dtype) + ~5 lane-padded
    f32 temporaries (x column, diff, square, exp + allocator slack) + the
    sublane-padded lane-dense x block (2 buffers x 8 sublanes x 4 B).
    """
    k_pad = ((k + 127) // 128) * 128
    bytes_per_row = 2 * out_itemsize * k_pad + 5 * 4 * k_pad + 2 * 8 * 4
    tile = vmem_budget_bytes // bytes_per_row
    tile = max(128, min(max_rows, (tile // 128) * 128))
    # No point in a tile taller than the (128-rounded) problem itself.
    tile = min(tile, max(128, ((n + 127) // 128) * 128))
    return int(tile)


def rbf_pallas(x, centers, gamma, *, row_tile=None, out_dtype=None):
    """Compute exp(-gamma * (x.reshape(-1,1) - centers.reshape(1,-1))**2).

    x:        any shape (flattened), math done in float32
    centers:  1-D array of K centers
    gamma:    python scalar or traced scalar (no recompile per value)
    returns:  (N, K) array, N = x.size, dtype = out_dtype (default: promoted
              dtype of x and centers, mirroring the PyTorch module).
    """
    x_arr = jnp.asarray(x)
    c_arr = jnp.asarray(centers)
    if out_dtype is None:
        out_dtype = jnp.result_type(x_arr.dtype, c_arr.dtype)
    out_itemsize = jnp.dtype(out_dtype).itemsize

    x_flat = jnp.ravel(x_arr).astype(jnp.float32)
    c_row = jnp.ravel(c_arr).astype(jnp.float32).reshape(1, -1)
    gamma_arr = jnp.asarray(gamma, dtype=jnp.float32).reshape(1, 1)
    n = x_flat.shape[0]
    k = c_row.shape[1]

    # Generation-aware VMEM budgeting: v5e/v6e report 128 MiB, v7x 64 MiB.
    vmem_cap = _vmem_capacity_bytes()
    small_vmem = vmem_cap < (100 << 20)            # v7x-class chip
    budget = (36 << 20) if small_vmem else (64 << 20)
    vmem_limit = (52 << 20) if small_vmem else (96 << 20)

    if row_tile is None:
        row_tile = _choose_row_tile(n, k, out_itemsize, budget, max_rows=16384)
        if small_vmem:
            # v7x has 2 TensorCores: keep >= ~4 grid steps so the "parallel"
            # row axis can actually be sharded across both cores.
            quarter = ((-(-n // 4)) + 127) // 128 * 128
            row_tile = max(128, min(row_tile, quarter))
    row_tile = max(128, (int(row_tile) // 128) * 128)

    num_tiles = pl.cdiv(n, row_tile)
    n_padded = num_tiles * row_tile
    # Pad only x (cheap: N*4 bytes) so input reads are in-bounds and
    # deterministic.  The (N, K) output is NOT padded or sliced; the partial
    # last row-tile's out-of-bounds stores are masked by Pallas.
    if n_padded != n:
        x_flat = jnp.pad(x_flat, (0, n_padded - n))
    x_tiles = x_flat.reshape(num_tiles, 1, row_tile)   # contiguous, lane-dense

    cost = pl.CostEstimate(
        flops=3 * n * k,
        transcendentals=n * k,
        bytes_accessed=n * 4 + k * 4 + n * k * out_itemsize,
    )

    out = pl.pallas_call(
        _rbf_kernel,
        out_shape=jax.ShapeDtypeStruct((n, k), out_dtype),
        grid_spec=pltpu.PrefetchScalarGridSpec(
            num_scalar_prefetch=0,
            grid=(num_tiles,),
            in_specs=[
                pl.BlockSpec((1, 1), lambda i: (0, 0)),              # gamma
                pl.BlockSpec((1, 1, row_tile), lambda i: (i, 0, 0)),  # x tile
                pl.BlockSpec((1, k), lambda i: (0, 0)),              # centers
            ],
            out_specs=pl.BlockSpec((row_tile, k), lambda i: (i, 0)),
        ),
        compiler_params=pltpu.CompilerParams(
            dimension_semantics=("parallel",),
            vmem_limit_bytes=vmem_limit,
        ),
        cost_estimate=cost,
    )(gamma_arr, x_tiles, c_row)
    return out


def _reference(x, centers, gamma):
    x_col = jnp.reshape(jnp.asarray(x), (-1, 1)).astype(jnp.float32)
    c_row = jnp.reshape(jnp.asarray(centers), (1, -1)).astype(jnp.float32)
    return jnp.exp(-gamma * jnp.square(x_col - c_row))


if __name__ == "__main__":
    key = jax.random.PRNGKey(0)

    # Deterministic "parameters" (mirrors RBF.__init__(centers, gamma)).
    K = 128
    centers = np.linspace(0.0, 2.0, K, dtype=np.float32)
    gamma = 10.0

    # Example input (any shape works; it gets flattened).
    x = jax.random.normal(key, (2, 4, 16, 16), dtype=jnp.float32)

    out = jax.block_until_ready(rbf_pallas(x, jnp.asarray(centers), gamma))
    ref = _reference(x, centers, gamma)
    np.testing.assert_allclose(np.asarray(out), np.asarray(ref),
                               rtol=1e-5, atol=1e-5)
    assert out.shape == (x.size, K)

    # Ragged case: N not a multiple of the row tile and K not a multiple of
    # 128 — exercises the masked partial-tile store path (no pad/slice of the
    # (N, K) output).
    K2 = 37
    centers2 = np.linspace(-1.0, 1.0, K2, dtype=np.float32)
    x2 = jax.random.normal(jax.random.PRNGKey(1), (3, 5, 7), dtype=jnp.float32)
    out2 = jax.block_until_ready(rbf_pallas(x2, jnp.asarray(centers2), 2.5))
    ref2 = _reference(x2, centers2, 2.5)
    np.testing.assert_allclose(np.asarray(out2), np.asarray(ref2),
                               rtol=1e-5, atol=1e-5)
    assert out2.shape == (x2.size, K2)

    print("KERNEL_OK")
</pallas_src>

<mosaic_0001>
module attributes {stable_mosaic.version = 11 : i64} {
  func.func @_rbf_kernel(%arg0: i32, %arg1: memref<1x1xf32, #tpu.memory_space<vmem>>, %arg2: memref<1x1x512xf32, #tpu.memory_space<vmem>>, %arg3: memref<1x128xf32, #tpu.memory_space<vmem>>, %arg4: memref<512x128xf32, #tpu.memory_space<vmem>>) attributes {dimension_semantics = [#tpu.dimension_semantics<parallel>], iteration_bounds = array<i64: 4>, scalar_prefetch = 0 : i64, scratch_operands = 0 : i64, tpu.core_type = #tpu.core_type<tc>, window_params = [{pipeline_mode = #tpu.pipeline_mode<synchronous>, transform_indices = @transform_0, window_bounds = array<i64: 1, 1>}, {transform_indices = @transform_1, window_bounds = array<i64: 1, 1, 512>}, {pipeline_mode = #tpu.pipeline_mode<synchronous>, transform_indices = @transform_2, window_bounds = array<i64: 1, 128>}, {transform_indices = @transform_3, window_bounds = array<i64: 512, 128>}]} {
    %c0 = arith.constant 0 : index
    %c0_0 = arith.constant 0 : index
    %0 = vector.load %arg1[%c0, %c0_0] : memref<1x1xf32, #tpu.memory_space<vmem>>, vector<1x1xf32>
    %cst = arith.constant 0.000000e+00 : f32
    %1 = vector.broadcast %cst : f32 to vector<1x1xf32>
    %2 = arith.subf %1, %0 : vector<1x1xf32>
    %c0_1 = arith.constant 0 : index
    %c0_2 = arith.constant 0 : index
    %c0_3 = arith.constant 0 : index
    %3 = vector.load %arg2[%c0_1, %c0_2, %c0_3] : memref<1x1x512xf32, #tpu.memory_space<vmem>>, vector<1x1x512xf32>
    %4 = vector.shape_cast %3 : vector<1x1x512xf32> to vector<1x512xf32>
    %5 = vector.shape_cast %4 : vector<1x512xf32> to vector<1x512xf32>
    %6 = vector.broadcast %5 : vector<1x512xf32> to vector<8x512xf32>
    %7 = tpu.transpose %6, [1, 0] : vector<8x512xf32> -> vector<512x8xf32>
    %8 = vector.extract_strided_slice %7 {offsets = [0, 0], sizes = [512, 1], strides = [1, 1]} : vector<512x8xf32> to vector<512x1xf32>
    %c0_4 = arith.constant 0 : index
    %c0_5 = arith.constant 0 : index
    %9 = vector.load %arg3[%c0_4, %c0_5] : memref<1x128xf32, #tpu.memory_space<vmem>>, vector<1x128xf32>
    %10 = vector.broadcast %8 : vector<512x1xf32> to vector<512x128xf32>
    %11 = vector.broadcast %9 : vector<1x128xf32> to vector<512x128xf32>
    %12 = arith.subf %10, %11 : vector<512x128xf32>
    %13 = arith.mulf %12, %12 : vector<512x128xf32>
    %14 = vector.broadcast %2 : vector<1x1xf32> to vector<512x128xf32>
    %15 = arith.mulf %13, %14 : vector<512x128xf32>
    %16 = math.exp %15 : vector<512x128xf32>
    %c0_6 = arith.constant 0 : index
    %c0_7 = arith.constant 0 : index
    %17 = vector.load %arg4[%c0_6, %c0_7] : memref<512x128xf32, #tpu.memory_space<vmem>>, vector<512x128xf32>
    tpu.vector_store %arg4[%c0_6, %c0_7], %16 {strides = array<i32>} : memref<512x128xf32, #tpu.memory_space<vmem>>, vector<512x128xf32>,
    return
  }
  func.func @transform_0(%arg0: i32) -> (i32, i32) {
    %c0_i32 = arith.constant 0 : i32
    %c0_i32_0 = arith.constant 0 : i32
    %c0_i32_1 = arith.constant 0 : i32
    return %c0_i32, %c0_i32_0 : i32, i32
  }
  func.func @transform_1(%arg0: i32) -> (i32, i32, i32) {
    %c0_i32 = arith.constant 0 : i32
    %c0_i32_0 = arith.constant 0 : i32
    %c0_i32_1 = arith.constant 0 : i32
    return %arg0, %c0_i32, %c0_i32_0 : i32, i32, i32
  }
  func.func @transform_2(%arg0: i32) -> (i32, i32) {
    %c0_i32 = arith.constant 0 : i32
    %c0_i32_0 = arith.constant 0 : i32
    %c0_i32_1 = arith.constant 0 : i32
    return %c0_i32, %c0_i32_0 : i32, i32
  }
  func.func @transform_3(%arg0: i32) -> (i32, i32) {
    %c0_i32 = arith.constant 0 : i32
    %c0_i32_0 = arith.constant 0 : i32
    return %arg0, %c0_i32 : i32, i32
  }
}

</mosaic_0001>

<llo_original>
// kernel: tpu_custom_call.1
$region0: #{tpu_custom_call.1}
  #allocation0 [shape = 'u32[]', space=smem, size = 0x4, offset = 0x4, fixed_abs, tag = 'smem constant byte address 0x4 - core index']
  #allocation1 [shape = 'u32[144,128]{1,0:T(1,128)}', space=vmem, size = 0x12000, scoped, tag = 'internal scratch']
  #allocation2 [shape = 'f32[1,1]{1,0:T(1,128)S(1)}', space=vmem, size = 0x200, scoped, tag = 'scoped memory for tpu_custom_call.1']
  %s0 = inlined_call_operand.<no memory space> [shape: f32[1,1], index: 0, kind: input, shape index: {}]
  %s1 = inlined_call_operand.hbm [shape: f32[4,1,512], index: 1, kind: input, shape index: {}]
  %s2 = inlined_call_operand.vmem [shape: f32[1,128], index: 2, kind: input, shape index: {}]
  %s3 = inlined_call_operand.hbm [shape: f32[2048,128], index: 3, kind: output, shape index: {}]
  %s4 = sld [smem:[#allocation0]]
  $region49: #{tpu_custom_call.1} parent=0
    _
  %s6 = ssub.s32 1, %s4
  %s7 = scalar_select 0, %s6, %s4
  %v8 = vstv %s0
  %9 = vst [vmem:[#allocation2] sm:$0x1] %v8
  $region1: #{tpu_custom_call.1} parent=0
    #allocation3 [shape = 'u8[4096]{0}', space=vmem, size = 0x1000, scoped, tag = 'input window, operand 1']
    #allocation4 [shape = 's32[2]{0}', space=sflag, size = 0x8, scoped, tag = 'scoped memory for tpu_custom_call.1']
    #allocation5 [shape = 's32[2]{0}', space=sflag, size = 0x8, scoped, tag = 'scoped memory for tpu_custom_call.1']
    #allocation6 [shape = 'u8[524288]{0}', space=vmem, size = 0x80000, scoped, tag = 'output window, operand 0']
    %10 = vsyncpa [#allocation4], 0
    %s11 = scalar_lea.sflag [#allocation4], 1
    %12 = vsyncpa %s11, 0
    %13 = vsyncpa [#allocation5], 0
    %s14 = scalar_lea.sflag [#allocation5], 1
    %15 = vsyncpa %s14, 0
    loop: start=0, step=1, limit=6
    $region2: #{tpu_custom_call.1} parent=1 // loop_pre_header
      _
    $region3: #{tpu_custom_call.1} parent=1 // loop_header
      %s17 = sphi 0, %s21
      %p18 = scmp.ge.s32.totalorder %s17, 6
      %s25 = sphi 0, %s25
      %s27 = sphi 0, %s25
      %s28 = sphi 0, %s27
      %s42 = sphi 0, %s28
      %s48 = sphi 0, %s50
      %s51 = sphi 0, %s48
      %s52 = sphi 0, %s51
      %s68 = sphi 0, %s52
      %s72 = sphi 0, %s72
      %s74 = sphi 0, %s72
      %s75 = sphi 0, %s74
      %s89 = sphi 0, %s75
      %s95 = sphi 0, %s97
      %s98 = sphi 0, %s95
      %s99 = sphi 0, %s98
      %s115 = sphi 0, %s99
    $region4: #{tpu_custom_call.1} parent=1 // loop_header_branch
      %20 = sbr.rel (%p18) target = $region8
    $region5: #{tpu_custom_call.1} parent=1 // loop_body
      %s22 = ssub.s32 %s17, 1
      %s23 = ssub.s32 %s17, 2
      %s24 = sadd.s32 %s17, 1
      %s26 = sadd.s32 %s25, 1
      %p29 = scmp.eq.s32.totalorder %s17, 3
      %p30 = scmp.ne.s32.totalorder %s25, %s27
      %p31 = scmp.eq.s32.totalorder %s17, 0
      %p32 = por %p30, %p31
      %p33 = scmp.ne.s32.totalorder %s25, %s27
      %p34 = scmp.eq.s32.totalorder %s22, 3
      %p35 = por %p33, %p34
      %p36 = scmp.ne.s32.totalorder %s27, %s28
      %p37 = scmp.eq.s32.totalorder %s22, 0
      %p38 = por %p36, %p37
      %p39 = scmp.ne.s32.totalorder %s27, %s28
      %p40 = scmp.eq.s32.totalorder %s23, 3
      %p41 = por %p39, %p40
      %p43 = scmp.ne.s32.totalorder %s28, %s42
      %p44 = scmp.eq.s32.totalorder %s23, 0
      %p45 = por %p43, %p44
      %s46 = ssub.s32 %s17, %s24
      %p47 = scmp.eq.s32.totalorder %s46, 0
      %s49 = sadd.s32 %s48, 1
      %s50 = scalar_select %p47, %s48, %s49
      %p53 = pneg %p47
      %p54 = scmp.eq.s32.totalorder %s17, 3
      %p55 = por %p53, %p54
      %p56 = scmp.ne.s32.totalorder %s48, %s51
      %p57 = scmp.eq.s32.totalorder %s17, 0
      %p58 = por %p56, %p57
      %p59 = scmp.ne.s32.totalorder %s48, %s51
      %p60 = scmp.eq.s32.totalorder %s22, 3
      %p61 = por %p59, %p60
      %p62 = scmp.ne.s32.totalorder %s51, %s52
      %p63 = scmp.eq.s32.totalorder %s22, 0
      %p64 = por %p62, %p63
      %p65 = scmp.ne.s32.totalorder %s51, %s52
      %p66 = scmp.eq.s32.totalorder %s23, 3
      %p67 = por %p65, %p66
      %p69 = scmp.ne.s32.totalorder %s52, %s68
      %p70 = scmp.eq.s32.totalorder %s23, 0
      %p71 = por %p69, %p70
      %s73 = sadd.s32 %s72, 1
      %p76 = scmp.eq.s32.totalorder %s17, 3
      %p77 = scmp.ne.s32.totalorder %s72, %s74
      %p78 = scmp.eq.s32.totalorder %s17, 0
      %p79 = por %p77, %p78
      %p80 = scmp.ne.s32.totalorder %s72, %s74
      %p81 = scmp.eq.s32.totalorder %s22, 3
      %p82 = por %p80, %p81
      %p83 = scmp.ne.s32.totalorder %s74, %s75
      %p84 = scmp.eq.s32.totalorder %s22, 0
      %p85 = por %p83, %p84
      %p86 = scmp.ne.s32.totalorder %s74, %s75
      %p87 = scmp.eq.s32.totalorder %s23, 3
      %p88 = por %p86, %p87
      %p90 = scmp.ne.s32.totalorder %s75, %s89
      %p91 = scmp.eq.s32.totalorder %s23, 0
      %p92 = por %p90, %p91
      %s93 = ssub.s32 %s17, %s24
      %p94 = scmp.eq.s32.totalorder %s93, 0
      %s96 = sadd.s32 %s95, 1
      %s97 = scalar_select %p94, %s95, %s96
      %p100 = pneg %p94
      %p101 = scmp.eq.s32.totalorder %s17, 3
      %p102 = por %p100, %p101
      %p103 = scmp.ne.s32.totalorder %s95, %s98
      %p104 = scmp.eq.s32.totalorder %s17, 0
      %p105 = por %p103, %p104
      %p106 = scmp.ne.s32.totalorder %s95, %s98
      %p107 = scmp.eq.s32.totalorder %s22, 3
      %p108 = por %p106, %p107
      %p109 = scmp.ne.s32.totalorder %s98, %s99
      %p110 = scmp.eq.s32.totalorder %s22, 0
      %p111 = por %p109, %p110
      %p112 = scmp.ne.s32.totalorder %s98, %s99
      %p113 = scmp.eq.s32.totalorder %s23, 3
      %p114 = por %p112, %p113
      %p116 = scmp.ne.s32.totalorder %s99, %s115
      %p117 = scmp.eq.s32.totalorder %s23, 0
      %p118 = por %p116, %p117
      %p119 = scmp.le.s32.totalorder 1, %s17
      %p120 = scmp.lt.s32.totalorder %s17, 5
      %p121 = pnand %p119, %p120
      %p122 = pneg %p121
      // Predicated region
      $region9: #{tpu_custom_call.1} parent=5 // pred_check
        _
      $region10: #{tpu_custom_call.1} parent=5 // pred_check_branch
        %124 = sbr.rel (%p121) target = $region12
      $region11: #{tpu_custom_call.1} parent=5 // pred_region
        %s125 = ssub.s32 %s17, 1
        // Predicated region
        $region13: #{tpu_custom_call.1} parent=11 // pred_check
          %p126 = pneg %p38
        $region14: #{tpu_custom_call.1} parent=11 // pred_check_branch
          %128 = sbr.rel (%p126) target = $region16
        $region15: #{tpu_custom_call.1} parent=11 // pred_region
          _
        $region16: #{tpu_custom_call.1} parent=11 // pred_fallthru
          _
        // Predicated region
        $region17: #{tpu_custom_call.1} parent=11 // pred_check
          %p129 = pneg %p85
        $region18: #{tpu_custom_call.1} parent=11 // pred_check_branch
          %131 = sbr.rel (%p129) target = $region20
        $region19: #{tpu_custom_call.1} parent=11 // pred_region
          _
        $region20: #{tpu_custom_call.1} parent=11 // pred_fallthru
          _
      $region12: #{tpu_custom_call.1} parent=5 // pred_fallthru
        _
      %p132 = scmp.lt.s32.totalorder %s17, 4
      // Predicated region
      $region21: #{tpu_custom_call.1} parent=5 // pred_check
        %p133 = pneg %p132
      $region22: #{tpu_custom_call.1} parent=5 // pred_check_branch
        %135 = sbr.rel (%p133) target = $region24
      $region23: #{tpu_custom_call.1} parent=5 // pred_region
        // Predicated region
        $region25: #{tpu_custom_call.1} parent=23 // pred_check
          %p136 = pneg %p58
        $region26: #{tpu_custom_call.1} parent=23 // pred_check_branch
          %138 = sbr.rel (%p136) target = $region28
        $region27: #{tpu_custom_call.1} parent=23 // pred_region
          %s139 = sand.u32 %s48, 1
          %s140 = scalar_lea.sflag [#allocation4], %s139
          %s141 = sand.u32 %s48, 1
          %s142 = smul.addr %s141, 4
          %s143 = scalar_lea.vmem [#allocation3], %s142
          %s145 = ssub.s32 64, 64
          %146 = vsyncadd %s140, %s145
          %s147 = smul.addr %s17, 4
          %s148 = smul.addr %s147, 16
          %s149 = scalar_lea.hbm %s1, %s148
          %s151 = sshll.u32 %s143, 4
          %s152 = int_to_ptr.vmem [resolvable:$true] %s151
          %154 = dma.hbm_to_vmem [thread:$0]  %s149, 64, %s152, %s140
        $region28: #{tpu_custom_call.1} parent=23 // pred_fallthru
          _
      $region24: #{tpu_custom_call.1} parent=5 // pred_fallthru
        _
      %p155 = scmp.le.s32.totalorder 1, %s17
      %p156 = scmp.lt.s32.totalorder %s17, 5
      %p157 = pnand %p155, %p156
      %p158 = pneg %p157
      // Predicated region
      $region29: #{tpu_custom_call.1} parent=5 // pred_check
        _
      $region30: #{tpu_custom_call.1} parent=5 // pred_check_branch
        %160 = sbr.rel (%p157) target = $region32
      $region31: #{tpu_custom_call.1} parent=5 // pred_region
        %s161 = ssub.s32 %s17, 1
        %s162 = sand.u32 %s51, 1
        %s163 = scalar_lea.sflag [#allocation4], %s162
        %s164 = sand.u32 %s51, 1
        %s165 = smul.addr %s164, 4
        %s166 = scalar_lea.vmem [#allocation3], %s165
        // Predicated region
        $region33: #{tpu_custom_call.1} parent=31 // pred_check
          %p167 = pneg %p64
        $region34: #{tpu_custom_call.1} parent=31 // pred_check_branch
          %169 = sbr.rel (%p167) target = $region36
        $region35: #{tpu_custom_call.1} parent=31 // pred_region
          %170 = dma.done %s163, 64
        $region36: #{tpu_custom_call.1} parent=31 // pred_fallthru
          _
        %p171 = pneg %p38
        %p172 = pneg %p35
        %s173 = sand.u32 %s51, 1
        %s174 = scalar_lea.sflag [#allocation4], %s173
        %s175 = sand.u32 %s51, 1
        %s176 = smul.addr %s175, 4
        %s177 = scalar_lea.vmem [#allocation3], %s176
        %p178 = pneg %p64
        %p179 = pneg %p61
        %p180 = pneg %p85
        %p181 = pneg %p82
        %p182 = pneg %p111
        %p183 = pneg %p108
        %s184 = sand.u32 %s98, 1
        %s185 = scalar_lea.sflag [#allocation5], %s184
        %s186 = sand.u32 %s98, 1
        %s187 = smul.addr %s186, 512
        %s188 = scalar_lea.vmem [#allocation6], %s187
        %s189 = smul.u32 64, %s22
        %v190 = vld [vmem:[#allocation2] sm:$0x1]
        %v191 = vsub.f32 0.0, %v190
        %v192 = vld [vmem:[%s166] sm:$0xf]
        %v194 = vlaneseq
        %v195 = vshrl.u32 %v194, 7
        %v196 = vsub.s32 0, %v195
        %v197 = vrot.slane %v192, %v196
        %v198 = vlaneseq
        %v199 = vshrl.u32 %v198, 7
        %v200 = vsub.s32 1, %v199
        %v201 = vrot.slane %v192, %v200
        %v202 = vlaneseq
        %v203 = vshrl.u32 %v202, 7
        %v204 = vsub.s32 2, %v203
        %v205 = vrot.slane %v192, %v204
        %v206 = vlaneseq
        %v207 = vshrl.u32 %v206, 7
        %v208 = vsub.s32 3, %v207
        %v209 = vrot.slane %v192, %v208
        %214 = vxpose.xlu0.b32.start [1/16] %v197, 128
        %215 = vxpose.xlu0.b32.cont [2/16] 0.0, 128
        %216 = vxpose.xlu0.b32.cont [3/16] 0.0, 128
        %217 = vxpose.xlu0.b32.cont [4/16] 0.0, 128
        %218 = vxpose.xlu0.b32.cont [5/16] 0.0, 128
        %219 = vxpose.xlu0.b32.cont [6/16] 0.0, 128
        %220 = vxpose.xlu0.b32.cont [7/16] 0.0, 128
        %221 = vxpose.xlu0.b32.cont [8/16] 0.0, 128
        %222 = vxpose.xlu0.b32.cont [9/16] 0.0, 128
        %223 = vxpose.xlu0.b32.cont [10/16] 0.0, 128
        %224 = vxpose.xlu0.b32.cont [11/16] 0.0, 128
        %225 = vxpose.xlu0.b32.cont [12/16] 0.0, 128
        %226 = vxpose.xlu0.b32.cont [13/16] 0.0, 128
        %227 = vxpose.xlu0.b32.cont [14/16] 0.0, 128
        %228 = vxpose.xlu0.b32.cont [15/16] 0.0, 128
        %229 = vxpose.xlu0.b32.end [16/16] 0.0, 128
        %v230 = vpop.trf.xlu0
        %v231 = vpop.trf.xlu0
        %v232 = vpop.trf.xlu0
        %v233 = vpop.trf.xlu0
        %v234 = vpop.trf.xlu0
        %v235 = vpop.trf.xlu0
        %v236 = vpop.trf.xlu0
        %v237 = vpop.trf.xlu0
        %v238 = vpop.trf.xlu0
        %v239 = vpop.trf.xlu0
        %v240 = vpop.trf.xlu0
        %v241 = vpop.trf.xlu0
        %v242 = vpop.trf.xlu0
        %v243 = vpop.trf.xlu0
        %v244 = vpop.trf.xlu0
        %v245 = vpop.trf.xlu0
        %246 = vxpose.xlu0.b32.start [1/16] %v201, 128
        %247 = vxpose.xlu0.b32.cont [2/16] 0.0, 128
        %248 = vxpose.xlu0.b32.cont [3/16] 0.0, 128
        %249 = vxpose.xlu0.b32.cont [4/16] 0.0, 128
        %250 = vxpose.xlu0.b32.cont [5/16] 0.0, 128
        %251 = vxpose.xlu0.b32.cont [6/16] 0.0, 128
        %252 = vxpose.xlu0.b32.cont [7/16] 0.0, 128
        %253 = vxpose.xlu0.b32.cont [8/16] 0.0, 128
        %254 = vxpose.xlu0.b32.cont [9/16] 0.0, 128
        %255 = vxpose.xlu0.b32.cont [10/16] 0.0, 128
        %256 = vxpose.xlu0.b32.cont [11/16] 0.0, 128
        %257 = vxpose.xlu0.b32.cont [12/16] 0.0, 128
        %258 = vxpose.xlu0.b32.cont [13/16] 0.0, 128
        %259 = vxpose.xlu0.b32.cont [14/16] 0.0, 128
        %260 = vxpose.xlu0.b32.cont [15/16] 0.0, 128
        %261 = vxpose.xlu0.b32.end [16/16] 0.0, 128
        %v262 = vpop.trf.xlu0
        %v263 = vpop.trf.xlu0
        %v264 = vpop.trf.xlu0
        %v265 = vpop.trf.xlu0
        %v266 = vpop.trf.xlu0
        %v267 = vpop.trf.xlu0
        %v268 = vpop.trf.xlu0
        %v269 = vpop.trf.xlu0
        %v270 = vpop.trf.xlu0
        %v271 = vpop.trf.xlu0
        %v272 = vpop.trf.xlu0
        %v273 = vpop.trf.xlu0
        %v274 = vpop.trf.xlu0
        %v275 = vpop.trf.xlu0
        %v276 = vpop.trf.xlu0
        %v277 = vpop.trf.xlu0
        %278 = vxpose.xlu0.b32.start [1/16] %v205, 128
        %279 = vxpose.xlu0.b32.cont [2/16] 0.0, 128
        %280 = vxpose.xlu0.b32.cont [3/16] 0.0, 128
        %281 = vxpose.xlu0.b32.cont [4/16] 0.0, 128
        %282 = vxpose.xlu0.b32.cont [5/16] 0.0, 128
        %283 = vxpose.xlu0.b32.cont [6/16] 0.0, 128
        %284 = vxpose.xlu0.b32.cont [7/16] 0.0, 128
        %285 = vxpose.xlu0.b32.cont [8/16] 0.0, 128
        %286 = vxpose.xlu0.b32.cont [9/16] 0.0, 128
        %287 = vxpose.xlu0.b32.cont [10/16] 0.0, 128
        %288 = vxpose.xlu0.b32.cont [11/16] 0.0, 128
        %289 = vxpose.xlu0.b32.cont [12/16] 0.0, 128
        %290 = vxpose.xlu0.b32.cont [13/16] 0.0, 128
        %291 = vxpose.xlu0.b32.cont [14/16] 0.0, 128
        %292 = vxpose.xlu0.b32.cont [15/16] 0.0, 128
        %293 = vxpose.xlu0.b32.end [16/16] 0.0, 128
        %v294 = vpop.trf.xlu0
        %v295 = vpop.trf.xlu0
        %v296 = vpop.trf.xlu0
        %v297 = vpop.trf.xlu0
        %v298 = vpop.trf.xlu0
        %v299 = vpop.trf.xlu0
        %v300 = vpop.trf.xlu0
        %v301 = vpop.trf.xlu0
        %v302 = vpop.trf.xlu0
        %v303 = vpop.trf.xlu0
        %v304 = vpop.trf.xlu0
        %v305 = vpop.trf.xlu0
        %v306 = vpop.trf.xlu0
        %v307 = vpop.trf.xlu0
        %v308 = vpop.trf.xlu0
        %v309 = vpop.trf.xlu0
        %310 = vxpose.xlu0.b32.start [1/16] %v209, 128
        %311 = vxpose.xlu0.b32.cont [2/16] 0.0, 128
        %312 = vxpose.xlu0.b32.cont [3/16] 0.0, 128
        %313 = vxpose.xlu0.b32.cont [4/16] 0.0, 128
        %314 = vxpose.xlu0.b32.cont [5/16] 0.0, 128
        %315 = vxpose.xlu0.b32.cont [6/16] 0.0, 128
        %316 = vxpose.xlu0.b32.cont [7/16] 0.0, 128
        %317 = vxpose.xlu0.b32.cont [8/16] 0.0, 128
        %318 = vxpose.xlu0.b32.cont [9/16] 0.0, 128
        %319 = vxpose.xlu0.b32.cont [10/16] 0.0, 128
        %320 = vxpose.xlu0.b32.cont [11/16] 0.0, 128
        %321 = vxpose.xlu0.b32.cont [12/16] 0.0, 128
        %322 = vxpose.xlu0.b32.cont [13/16] 0.0, 128
        %323 = vxpose.xlu0.b32.cont [14/16] 0.0, 128
        %324 = vxpose.xlu0.b32.cont [15/16] 0.0, 128
        %325 = vxpose.xlu0.b32.end [16/16] 0.0, 128
        %v326 = vpop.trf.xlu0
        %v327 = vpop.trf.xlu0
        %v328 = vpop.trf.xlu0
        %v329 = vpop.trf.xlu0
        %v330 = vpop.trf.xlu0
        %v331 = vpop.trf.xlu0
        %v332 = vpop.trf.xlu0
        %v333 = vpop.trf.xlu0
        %v334 = vpop.trf.xlu0
        %v335 = vpop.trf.xlu0
        %v336 = vpop.trf.xlu0
        %v337 = vpop.trf.xlu0
        %v338 = vpop.trf.xlu0
        %v339 = vpop.trf.xlu0
        %v340 = vpop.trf.xlu0
        %v341 = vpop.trf.xlu0
        %v342 = vld [vmem:[%s2] sm:$0x1]
        %344 = vset.pattern.permute.xlu0 0
        %345 = vperm.xlu0 %344, %v230
        %v346 = vpop.permute.xlu0 %345
        %349 = vset.pattern.permute.xlu0 0
        %350 = vperm.xlu0 %349, %v231
        %v351 = vpop.permute.xlu0 %350
        %354 = vset.pattern.permute.xlu0 0
        %355 = vperm.xlu0 %354, %v232
        %v356 = vpop.permute.xlu0 %355
        %359 = vset.pattern.permute.xlu0 0
        %360 = vperm.xlu0 %359, %v233
        %v361 = vpop.permute.xlu0 %360
        %364 = vset.pattern.permute.xlu0 0
        %365 = vperm.xlu0 %364, %v234
        %v366 = vpop.permute.xlu0 %365
        %369 = vset.pattern.permute.xlu0 0
        %370 = vperm.xlu0 %369, %v235
        %v371 = vpop.permute.xlu0 %370
        %374 = vset.pattern.permute.xlu0 0
        %375 = vperm.xlu0 %374, %v236
        %v376 = vpop.permute.xlu0 %375
        %379 = vset.pattern.permute.xlu0 0
        %380 = vperm.xlu0 %379, %v237
        %v381 = vpop.permute.xlu0 %380
        %384 = vset.pattern.permute.xlu0 0
        %385 = vperm.xlu0 %384, %v238
        %v386 = vpop.permute.xlu0 %385
        %389 = vset.pattern.permute.xlu0 0
        %390 = vperm.xlu0 %389, %v239
        %v391 = vpop.permute.xlu0 %390
        %394 = vset.pattern.permute.xlu0 0
        %395 = vperm.xlu0 %394, %v240
        %v396 = vpop.permute.xlu0 %395
        %399 = vset.pattern.permute.xlu0 0
        %400 = vperm.xlu0 %399, %v241
        %v401 = vpop.permute.xlu0 %400
        %404 = vset.pattern.permute.xlu0 0
        %405 = vperm.xlu0 %404, %v242
        %v406 = vpop.permute.xlu0 %405
        %409 = vset.pattern.permute.xlu0 0
        %410 = vperm.xlu0 %409, %v243
        %v411 = vpop.permute.xlu0 %410
        %414 = vset.pattern.permute.xlu0 0
        %415 = vperm.xlu0 %414, %v244
        %v416 = vpop.permute.xlu0 %415
        %419 = vset.pattern.permute.xlu0 0
        %420 = vperm.xlu0 %419, %v245
        %v421 = vpop.permute.xlu0 %420
        %424 = vset.pattern.permute.xlu0 0
        %425 = vperm.xlu0 %424, %v262
        %v426 = vpop.permute.xlu0 %425
        %429 = vset.pattern.permute.xlu0 0
        %430 = vperm.xlu0 %429, %v263
        %v431 = vpop.permute.xlu0 %430
        %434 = vset.pattern.permute.xlu0 0
        %435 = vperm.xlu0 %434, %v264
        %v436 = vpop.permute.xlu0 %435
        %439 = vset.pattern.permute.xlu0 0
        %440 = vperm.xlu0 %439, %v265
        %v441 = vpop.permute.xlu0 %440
        %444 = vset.pattern.permute.xlu0 0
        %445 = vperm.xlu0 %444, %v266
        %v446 = vpop.permute.xlu0 %445
        %449 = vset.pattern.permute.xlu0 0
        %450 = vperm.xlu0 %449, %v267
        %v451 = vpop.permute.xlu0 %450
        %454 = vset.pattern.permute.xlu0 0
        %455 = vperm.xlu0 %454, %v268
        %v456 = vpop.permute.xlu0 %455
        %459 = vset.pattern.permute.xlu0 0
        %460 = vperm.xlu0 %459, %v269
        %v461 = vpop.permute.xlu0 %460
        %464 = vset.pattern.permute.xlu0 0
        %465 = vperm.xlu0 %464, %v270
        %v466 = vpop.permute.xlu0 %465
        %469 = vset.pattern.permute.xlu0 0
        %470 = vperm.xlu0 %469, %v271
        %v471 = vpop.permute.xlu0 %470
        %474 = vset.pattern.permute.xlu0 0
        %475 = vperm.xlu0 %474, %v272
        %v476 = vpop.permute.xlu0 %475
        %479 = vset.pattern.permute.xlu0 0
        %480 = vperm.xlu0 %479, %v273
        %v481 = vpop.permute.xlu0 %480
        %484 = vset.pattern.permute.xlu0 0
        %485 = vperm.xlu0 %484, %v274
        %v486 = vpop.permute.xlu0 %485
        %489 = vset.pattern.permute.xlu0 0
        %490 = vperm.xlu0 %489, %v275
        %v491 = vpop.permute.xlu0 %490
        %494 = vset.pattern.permute.xlu0 0
        %495 = vperm.xlu0 %494, %v276
        %v496 = vpop.permute.xlu0 %495
        %499 = vset.pattern.permute.xlu0 0
        %500 = vperm.xlu0 %499, %v277
        %v501 = vpop.permute.xlu0 %500
        %504 = vset.pattern.permute.xlu0 0
        %505 = vperm.xlu0 %504, %v294
        %v506 = vpop.permute.xlu0 %505
        %509 = vset.pattern.permute.xlu0 0
        %510 = vperm.xlu0 %509, %v295
        %v511 = vpop.permute.xlu0 %510
        %514 = vset.pattern.permute.xlu0 0
        %515 = vperm.xlu0 %514, %v296
        %v516 = vpop.permute.xlu0 %515
        %519 = vset.pattern.permute.xlu0 0
        %520 = vperm.xlu0 %519, %v297
        %v521 = vpop.permute.xlu0 %520
        %524 = vset.pattern.permute.xlu0 0
        %525 = vperm.xlu0 %524, %v298
        %v526 = vpop.permute.xlu0 %525
        %529 = vset.pattern.permute.xlu0 0
        %530 = vperm.xlu0 %529, %v299
        %v531 = vpop.permute.xlu0 %530
        %534 = vset.pattern.permute.xlu0 0
        %535 = vperm.xlu0 %534, %v300
        %v536 = vpop.permute.xlu0 %535
        %539 = vset.pattern.permute.xlu0 0
        %540 = vperm.xlu0 %539, %v301
        %v541 = vpop.permute.xlu0 %540
        %544 = vset.pattern.permute.xlu0 0
        %545 = vperm.xlu0 %544, %v302
        %v546 = vpop.permute.xlu0 %545
        %549 = vset.pattern.permute.xlu0 0
        %550 = vperm.xlu0 %549, %v303
        %v551 = vpop.permute.xlu0 %550
        %554 = vset.pattern.permute.xlu0 0
        %555 = vperm.xlu0 %554, %v304
        %v556 = vpop.permute.xlu0 %555
        %559 = vset.pattern.permute.xlu0 0
        %560 = vperm.xlu0 %559, %v305
        %v561 = vpop.permute.xlu0 %560
        %564 = vset.pattern.permute.xlu0 0
        %565 = vperm.xlu0 %564, %v306
        %v566 = vpop.permute.xlu0 %565
        %569 = vset.pattern.permute.xlu0 0
        %570 = vperm.xlu0 %569, %v307
        %v571 = vpop.permute.xlu0 %570
        %574 = vset.pattern.permute.xlu0 0
        %575 = vperm.xlu0 %574, %v308
        %v576 = vpop.permute.xlu0 %575
        %579 = vset.pattern.permute.xlu0 0
        %580 = vperm.xlu0 %579, %v309
        %v581 = vpop.permute.xlu0 %580
        %584 = vset.pattern.permute.xlu0 0
        %585 = vperm.xlu0 %584, %v326
        %v586 = vpop.permute.xlu0 %585
        %589 = vset.pattern.permute.xlu0 0
        %590 = vperm.xlu0 %589, %v327
        %v591 = vpop.permute.xlu0 %590
        %594 = vset.pattern.permute.xlu0 0
        %595 = vperm.xlu0 %594, %v328
        %v596 = vpop.permute.xlu0 %595
        %599 = vset.pattern.permute.xlu0 0
        %600 = vperm.xlu0 %599, %v329
        %v601 = vpop.permute.xlu0 %600
        %604 = vset.pattern.permute.xlu0 0
        %605 = vperm.xlu0 %604, %v330
        %v606 = vpop.permute.xlu0 %605
        %609 = vset.pattern.permute.xlu0 0
        %610 = vperm.xlu0 %609, %v331
        %v611 = vpop.permute.xlu0 %610
        %614 = vset.pattern.permute.xlu0 0
        %615 = vperm.xlu0 %614, %v332
        %v616 = vpop.permute.xlu0 %615
        %619 = vset.pattern.permute.xlu0 0
        %620 = vperm.xlu0 %619, %v333
        %v621 = vpop.permute.xlu0 %620
        %624 = vset.pattern.permute.xlu0 0
        %625 = vperm.xlu0 %624, %v334
        %v626 = vpop.permute.xlu0 %625
        %629 = vset.pattern.permute.xlu0 0
        %630 = vperm.xlu0 %629, %v335
        %v631 = vpop.permute.xlu0 %630
        %634 = vset.pattern.permute.xlu0 0
        %635 = vperm.xlu0 %634, %v336
        %v636 = vpop.permute.xlu0 %635
        %639 = vset.pattern.permute.xlu0 0
        %640 = vperm.xlu0 %639, %v337
        %v641 = vpop.permute.xlu0 %640
        %644 = vset.pattern.permute.xlu0 0
        %645 = vperm.xlu0 %644, %v338
        %v646 = vpop.permute.xlu0 %645
        %649 = vset.pattern.permute.xlu0 0
        %650 = vperm.xlu0 %649, %v339
        %v651 = vpop.permute.xlu0 %650
        %654 = vset.pattern.permute.xlu0 0
        %655 = vperm.xlu0 %654, %v340
        %v656 = vpop.permute.xlu0 %655
        %659 = vset.pattern.permute.xlu0 0
        %660 = vperm.xlu0 %659, %v341
        %v661 = vpop.permute.xlu0 %660
        %v664 = vlaneseq
        %v665 = vshrl.u32 %v664, 7
        %v666 = vsub.s32 0, %v665
        %v667 = vrot.slane %v342, %v666
        %v669 = vsub.f32 %v346, %v667
        %v670 = vsub.f32 %v351, %v667
        %v671 = vsub.f32 %v356, %v667
        %v672 = vsub.f32 %v361, %v667
        %v673 = vsub.f32 %v366, %v667
        %v674 = vsub.f32 %v371, %v667
        %v675 = vsub.f32 %v376, %v667
        %v676 = vsub.f32 %v381, %v667
        %v677 = vsub.f32 %v386, %v667
        %v678 = vsub.f32 %v391, %v667
        %v679 = vsub.f32 %v396, %v667
        %v680 = vsub.f32 %v401, %v667
        %v681 = vsub.f32 %v406, %v667
        %v682 = vsub.f32 %v411, %v667
        %v683 = vsub.f32 %v416, %v667
        %v684 = vsub.f32 %v421, %v667
        %v685 = vsub.f32 %v426, %v667
        %v686 = vsub.f32 %v431, %v667
        %v687 = vsub.f32 %v436, %v667
        %v688 = vsub.f32 %v441, %v667
        %v689 = vsub.f32 %v446, %v667
        %v690 = vsub.f32 %v451, %v667
        %v691 = vsub.f32 %v456, %v667
        %v692 = vsub.f32 %v461, %v667
        %v693 = vsub.f32 %v466, %v667
        %v694 = vsub.f32 %v471, %v667
        %v695 = vsub.f32 %v476, %v667
        %v696 = vsub.f32 %v481, %v667
        %v697 = vsub.f32 %v486, %v667
        %v698 = vsub.f32 %v491, %v667
        %v699 = vsub.f32 %v496, %v667
        %v700 = vsub.f32 %v501, %v667
        %v701 = vsub.f32 %v506, %v667
        %v702 = vsub.f32 %v511, %v667
        %v703 = vsub.f32 %v516, %v667
        %v704 = vsub.f32 %v521, %v667
        %v705 = vsub.f32 %v526, %v667
        %v706 = vsub.f32 %v531, %v667
        %v707 = vsub.f32 %v536, %v667
        %v708 = vsub.f32 %v541, %v667
        %v709 = vsub.f32 %v546, %v667
        %v710 = vsub.f32 %v551, %v667
        %v711 = vsub.f32 %v556, %v667
        %v712 = vsub.f32 %v561, %v667
        %v713 = vsub.f32 %v566, %v667
        %v714 = vsub.f32 %v571, %v667
        %v715 = vsub.f32 %v576, %v667
        %v716 = vsub.f32 %v581, %v667
        %v717 = vsub.f32 %v586, %v667
        %v718 = vsub.f32 %v591, %v667
        %v719 = vsub.f32 %v596, %v667
        %v720 = vsub.f32 %v601, %v667
        %v721 = vsub.f32 %v606, %v667
        %v722 = vsub.f32 %v611, %v667
        %v723 = vsub.f32 %v616, %v667
        %v724 = vsub.f32 %v621, %v667
        %v725 = vsub.f32 %v626, %v667
        %v726 = vsub.f32 %v631, %v667
        %v727 = vsub.f32 %v636, %v667
        %v728 = vsub.f32 %v641, %v667
        %v729 = vsub.f32 %v646, %v667
        %v730 = vsub.f32 %v651, %v667
        %v731 = vsub.f32 %v656, %v667
        %v732 = vsub.f32 %v661, %v667
        %v733 = vmul.f32 %v669, %v669
        %v734 = vmul.f32 %v670, %v670
        %v735 = vmul.f32 %v671, %v671
        %v736 = vmul.f32 %v672, %v672
        %v737 = vmul.f32 %v673, %v673
        %v738 = vmul.f32 %v674, %v674
        %v739 = vmul.f32 %v675, %v675
        %v740 = vmul.f32 %v676, %v676
        %v741 = vmul.f32 %v677, %v677
        %v742 = vmul.f32 %v678, %v678
        %v743 = vmul.f32 %v679, %v679
        %v744 = vmul.f32 %v680, %v680
        %v745 = vmul.f32 %v681, %v681
        %v746 = vmul.f32 %v682, %v682
        %v747 = vmul.f32 %v683, %v683
        %v748 = vmul.f32 %v684, %v684
        %v749 = vmul.f32 %v685, %v685
        %v750 = vmul.f32 %v686, %v686
        %v751 = vmul.f32 %v687, %v687
        %v752 = vmul.f32 %v688, %v688
        %v753 = vmul.f32 %v689, %v689
        %v754 = vmul.f32 %v690, %v690
        %v755 = vmul.f32 %v691, %v691
        %v756 = vmul.f32 %v692, %v692
        %v757 = vmul.f32 %v693, %v693
        %v758 = vmul.f32 %v694, %v694
        %v759 = vmul.f32 %v695, %v695
        %v760 = vmul.f32 %v696, %v696
        %v761 = vmul.f32 %v697, %v697
        %v762 = vmul.f32 %v698, %v698
        %v763 = vmul.f32 %v699, %v699
        %v764 = vmul.f32 %v700, %v700
        %v765 = vmul.f32 %v701, %v701
        %v766 = vmul.f32 %v702, %v702
        %v767 = vmul.f32 %v703, %v703
        %v768 = vmul.f32 %v704, %v704
        %v769 = vmul.f32 %v705, %v705
        %v770 = vmul.f32 %v706, %v706
        %v771 = vmul.f32 %v707, %v707
        %v772 = vmul.f32 %v708, %v708
        %v773 = vmul.f32 %v709, %v709
        %v774 = vmul.f32 %v710, %v710
        %v775 = vmul.f32 %v711, %v711
        %v776 = vmul.f32 %v712, %v712
        %v777 = vmul.f32 %v713, %v713
        %v778 = vmul.f32 %v714, %v714
        %v779 = vmul.f32 %v715, %v715
        %v780 = vmul.f32 %v716, %v716
        %v781 = vmul.f32 %v717, %v717
        %v782 = vmul.f32 %v718, %v718
        %v783 = vmul.f32 %v719, %v719
        %v784 = vmul.f32 %v720, %v720
        %v785 = vmul.f32 %v721, %v721
        %v786 = vmul.f32 %v722, %v722
        %v787 = vmul.f32 %v723, %v723
        %v788 = vmul.f32 %v724, %v724
        %v789 = vmul.f32 %v725, %v725
        %v790 = vmul.f32 %v726, %v726
        %v791 = vmul.f32 %v727, %v727
        %v792 = vmul.f32 %v728, %v728
        %v793 = vmul.f32 %v729, %v729
        %v794 = vmul.f32 %v730, %v730
        %v795 = vmul.f32 %v731, %v731
        %v796 = vmul.f32 %v732, %v732
        %v798 = vlaneseq
        %v799 = vshrl.u32 %v798, 7
        %v800 = vsub.s32 0, %v799
        %v801 = vrot.slane %v191, %v800
        %802 = vset.pattern.permute.xlu0 0
        %803 = vperm.xlu0 %802, %v801
        %v804 = vpop.permute.xlu0 %803
        %v806 = vmul.f32 %v733, %v804
        %v807 = vmul.f32 %v734, %v804
        %v808 = vmul.f32 %v735, %v804
        %v809 = vmul.f32 %v736, %v804
        %v810 = vmul.f32 %v737, %v804
        %v811 = vmul.f32 %v738, %v804
        %v812 = vmul.f32 %v739, %v804
        %v813 = vmul.f32 %v740, %v804
        %v814 = vmul.f32 %v741, %v804
        %v815 = vmul.f32 %v742, %v804
        %v816 = vmul.f32 %v743, %v804
        %v817 = vmul.f32 %v744, %v804
        %v818 = vmul.f32 %v745, %v804
        %v819 = vmul.f32 %v746, %v804
        %v820 = vmul.f32 %v747, %v804
        %v821 = vmul.f32 %v748, %v804
        %v822 = vmul.f32 %v749, %v804
        %v823 = vmul.f32 %v750, %v804
        %v824 = vmul.f32 %v751, %v804
        %v825 = vmul.f32 %v752, %v804
        %v826 = vmul.f32 %v753, %v804
        %v827 = vmul.f32 %v754, %v804
        %v828 = vmul.f32 %v755, %v804
        %v829 = vmul.f32 %v756, %v804
        %v830 = vmul.f32 %v757, %v804
        %v831 = vmul.f32 %v758, %v804
        %v832 = vmul.f32 %v759, %v804
        %v833 = vmul.f32 %v760, %v804
        %v834 = vmul.f32 %v761, %v804
        %v835 = vmul.f32 %v762, %v804
        %v836 = vmul.f32 %v763, %v804
        %v837 = vmul.f32 %v764, %v804
        %v838 = vmul.f32 %v765, %v804
        %v839 = vmul.f32 %v766, %v804
        %v840 = vmul.f32 %v767, %v804
        %v841 = vmul.f32 %v768, %v804
        %v842 = vmul.f32 %v769, %v804
        %v843 = vmul.f32 %v770, %v804
        %v844 = vmul.f32 %v771, %v804
        %v845 = vmul.f32 %v772, %v804
        %v846 = vmul.f32 %v773, %v804
        %v847 = vmul.f32 %v774, %v804
        %v848 = vmul.f32 %v775, %v804
        %v849 = vmul.f32 %v776, %v804
        %v850 = vmul.f32 %v777, %v804
        %v851 = vmul.f32 %v778, %v804
        %v852 = vmul.f32 %v779, %v804
        %v853 = vmul.f32 %v780, %v804
        %v854 = vmul.f32 %v781, %v804
        %v855 = vmul.f32 %v782, %v804
        %v856 = vmul.f32 %v783, %v804
        %v857 = vmul.f32 %v784, %v804
        %v858 = vmul.f32 %v785, %v804
        %v859 = vmul.f32 %v786, %v804
        %v860 = vmul.f32 %v787, %v804
        %v861 = vmul.f32 %v788, %v804
        %v862 = vmul.f32 %v789, %v804
        %v863 = vmul.f32 %v790, %v804
        %v864 = vmul.f32 %v791, %v804
        %v865 = vmul.f32 %v792, %v804
        %v866 = vmul.f32 %v793, %v804
        %v867 = vmul.f32 %v794, %v804
        %v868 = vmul.f32 %v795, %v804
        %v869 = vmul.f32 %v796, %v804
        %v870 = vmul.f32 %v806, 1.442695
        %v871 = vpow.pop %v870
        %v872 = vmul.f32 %v807, 1.442695
        %v873 = vpow.pop %v872
        %v874 = vmul.f32 %v808, 1.442695
        %v875 = vpow.pop %v874
        %v876 = vmul.f32 %v809, 1.442695
        %v877 = vpow.pop %v876
        %v878 = vmul.f32 %v810, 1.442695
        %v879 = vpow.pop %v878
        %v880 = vmul.f32 %v811, 1.442695
        %v881 = vpow.pop %v880
        %v882 = vmul.f32 %v812, 1.442695
        %v883 = vpow.pop %v882
        %v884 = vmul.f32 %v813, 1.442695
        %v885 = vpow.pop %v884
        %v886 = vmul.f32 %v814, 1.442695
        %v887 = vpow.pop %v886
        %v888 = vmul.f32 %v815, 1.442695
        %v889 = vpow.pop %v888
        %v890 = vmul.f32 %v816, 1.442695
        %v891 = vpow.pop %v890
        %v892 = vmul.f32 %v817, 1.442695
        %v893 = vpow.pop %v892
        %v894 = vmul.f32 %v818, 1.442695
        %v895 = vpow.pop %v894
        %v896 = vmul.f32 %v819, 1.442695
        %v897 = vpow.pop %v896
        %v898 = vmul.f32 %v820, 1.442695
        %v899 = vpow.pop %v898
        %v900 = vmul.f32 %v821, 1.442695
        %v901 = vpow.pop %v900
        %v902 = vmul.f32 %v822, 1.442695
        %v903 = vpow.pop %v902
        %v904 = vmul.f32 %v823, 1.442695
        %v905 = vpow.pop %v904
        %v906 = vmul.f32 %v824, 1.442695
        %v907 = vpow.pop %v906
        %v908 = vmul.f32 %v825, 1.442695
        %v909 = vpow.pop %v908
        %v910 = vmul.f32 %v826, 1.442695
        %v911 = vpow.pop %v910
        %v912 = vmul.f32 %v827, 1.442695
        %v913 = vpow.pop %v912
        %v914 = vmul.f32 %v828, 1.442695
        %v915 = vpow.pop %v914
        %v916 = vmul.f32 %v829, 1.442695
        %v917 = vpow.pop %v916
        %v918 = vmul.f32 %v830, 1.442695
        %v919 = vpow.pop %v918
        %v920 = vmul.f32 %v831, 1.442695
        %v921 = vpow.pop %v920
        %v922 = vmul.f32 %v832, 1.442695
        %v923 = vpow.pop %v922
        %v924 = vmul.f32 %v833, 1.442695
        %v925 = vpow.pop %v924
        %v926 = vmul.f32 %v834, 1.442695
        %v927 = vpow.pop %v926
        %v928 = vmul.f32 %v835, 1.442695
        %v929 = vpow.pop %v928
        %v930 = vmul.f32 %v836, 1.442695
        %v931 = vpow.pop %v930
        %v932 = vmul.f32 %v837, 1.442695
        %v933 = vpow.pop %v932
        %v934 = vmul.f32 %v838, 1.442695
        %v935 = vpow.pop %v934
        %v936 = vmul.f32 %v839, 1.442695
        %v937 = vpow.pop %v936
        %v938 = vmul.f32 %v840, 1.442695
        %v939 = vpow.pop %v938
        %v940 = vmul.f32 %v841, 1.442695
        %v941 = vpow.pop %v940
        %v942 = vmul.f32 %v842, 1.442695
        %v943 = vpow.pop %v942
        %v944 = vmul.f32 %v843, 1.442695
        %v945 = vpow.pop %v944
        %v946 = vmul.f32 %v844, 1.442695
        %v947 = vpow.pop %v946
        %v948 = vmul.f32 %v845, 1.442695
        %v949 = vpow.pop %v948
        %v950 = vmul.f32 %v846, 1.442695
        %v951 = vpow.pop %v950
        %v952 = vmul.f32 %v847, 1.442695
        %v953 = vpow.pop %v952
        %v954 = vmul.f32 %v848, 1.442695
        %v955 = vpow.pop %v954
        %v956 = vmul.f32 %v849, 1.442695
        %v957 = vpow.pop %v956
        %v958 = vmul.f32 %v850, 1.442695
        %v959 = vpow.pop %v958
        %v960 = vmul.f32 %v851, 1.442695
        %v961 = vpow.pop %v960
        %v962 = vmul.f32 %v852, 1.442695
        %v963 = vpow.pop %v962
        %v964 = vmul.f32 %v853, 1.442695
        %v965 = vpow.pop %v964
        %v966 = vmul.f32 %v854, 1.442695
        %v967 = vpow.pop %v966
        %v968 = vmul.f32 %v855, 1.442695
        %v969 = vpow.pop %v968
        %v970 = vmul.f32 %v856, 1.442695
        %v971 = vpow.pop %v970
        %v972 = vmul.f32 %v857, 1.442695
        %v973 = vpow.pop %v972
        %v974 = vmul.f32 %v858, 1.442695
        %v975 = vpow.pop %v974
        %v976 = vmul.f32 %v859, 1.442695
        %v977 = vpow.pop %v976
        %v978 = vmul.f32 %v860, 1.442695
        %v979 = vpow.pop %v978
        %v980 = vmul.f32 %v861, 1.442695
        %v981 = vpow.pop %v980
        %v982 = vmul.f32 %v862, 1.442695
        %v983 = vpow.pop %v982
        %v984 = vmul.f32 %v863, 1.442695
        %v985 = vpow.pop %v984
        %v986 = vmul.f32 %v864, 1.442695
        %v987 = vpow.pop %v986
        %v988 = vmul.f32 %v865, 1.442695
        %v989 = vpow.pop %v988
        %v990 = vmul.f32 %v866, 1.442695
        %v991 = vpow.pop %v990
        %v992 = vmul.f32 %v867, 1.442695
        %v993 = vpow.pop %v992
        %v994 = vmul.f32 %v868, 1.442695
        %v995 = vpow.pop %v994
        %v996 = vmul.f32 %v869, 1.442695
        %v997 = vpow.pop %v996
        %998 = vst [vmem:[%s188] sm:$0xff] %v871
        %999 = vst [vmem:[%s188 + $0x8] sm:$0xff] %v873
        %1000 = vst [vmem:[%s188 + $0x10] sm:$0xff] %v875
        %1001 = vst [vmem:[%s188 + $0x18] sm:$0xff] %v877
        %1002 = vst [vmem:[%s188 + $0x20] sm:$0xff] %v879
        %1003 = vst [vmem:[%s188 + $0x28] sm:$0xff] %v881
        %1004 = vst [vmem:[%s188 + $0x30] sm:$0xff] %v883
        %1005 = vst [vmem:[%s188 + $0x38] sm:$0xff] %v885
        %1006 = vst [vmem:[%s188 + $0x40] sm:$0xff] %v887
        %1007 = vst [vmem:[%s188 + $0x48] sm:$0xff] %v889
        %1008 = vst [vmem:[%s188 + $0x50] sm:$0xff] %v891
        %1009 = vst [vmem:[%s188 + $0x58] sm:$0xff] %v893
        %1010 = vst [vmem:[%s188 + $0x60] sm:$0xff] %v895
        %1011 = vst [vmem:[%s188 + $0x68] sm:$0xff] %v897
        %1012 = vst [vmem:[%s188 + $0x70] sm:$0xff] %v899
        %1013 = vst [vmem:[%s188 + $0x78] sm:$0xff] %v901
        %1014 = vst [vmem:[%s188 + $0x80] sm:$0xff] %v903
        %1015 = vst [vmem:[%s188 + $0x88] sm:$0xff] %v905
        %1016 = vst [vmem:[%s188 + $0x90] sm:$0xff] %v907
        %1017 = vst [vmem:[%s188 + $0x98] sm:$0xff] %v909
        %1018 = vst [vmem:[%s188 + $0xa0] sm:$0xff] %v911
        %1019 = vst [vmem:[%s188 + $0xa8] sm:$0xff] %v913
        %1020 = vst [vmem:[%s188 + $0xb0] sm:$0xff] %v915
        %1021 = vst [vmem:[%s188 + $0xb8] sm:$0xff] %v917
        %1022 = vst [vmem:[%s188 + $0xc0] sm:$0xff] %v919
        %1023 = vst [vmem:[%s188 + $0xc8] sm:$0xff] %v921
        %1024 = vst [vmem:[%s188 + $0xd0] sm:$0xff] %v923
        %1025 = vst [vmem:[%s188 + $0xd8] sm:$0xff] %v925
        %1026 = vst [vmem:[%s188 + $0xe0] sm:$0xff] %v927
        %1027 = vst [vmem:[%s188 + $0xe8] sm:$0xff] %v929
        %1028 = vst [vmem:[%s188 + $0xf0] sm:$0xff] %v931
        %1029 = vst [vmem:[%s188 + $0xf8] sm:$0xff] %v933
        %1030 = vst [vmem:[%s188 + $0x100] sm:$0xff] %v935
        %1031 = vst [vmem:[%s188 + $0x108] sm:$0xff] %v937
        %1032 = vst [vmem:[%s188 + $0x110] sm:$0xff] %v939
        %1033 = vst [vmem:[%s188 + $0x118] sm:$0xff] %v941
        %1034 = vst [vmem:[%s188 + $0x120] sm:$0xff] %v943
        %1035 = vst [vmem:[%s188 + $0x128] sm:$0xff] %v945
        %1036 = vst [vmem:[%s188 + $0x130] sm:$0xff] %v947
        %1037 = vst [vmem:[%s188 + $0x138] sm:$0xff] %v949
        %1038 = vst [vmem:[%s188 + $0x140] sm:$0xff] %v951
        %1039 = vst [vmem:[%s188 + $0x148] sm:$0xff] %v953
        %1040 = vst [vmem:[%s188 + $0x150] sm:$0xff] %v955
        %1041 = vst [vmem:[%s188 + $0x158] sm:$0xff] %v957
        %1042 = vst [vmem:[%s188 + $0x160] sm:$0xff] %v959
        %1043 = vst [vmem:[%s188 + $0x168] sm:$0xff] %v961
        %1044 = vst [vmem:[%s188 + $0x170] sm:$0xff] %v963
        %1045 = vst [vmem:[%s188 + $0x178] sm:$0xff] %v965
        %1046 = vst [vmem:[%s188 + $0x180] sm:$0xff] %v967
        %1047 = vst [vmem:[%s188 + $0x188] sm:$0xff] %v969
        %1048 = vst [vmem:[%s188 + $0x190] sm:$0xff] %v971
        %1049 = vst [vmem:[%s188 + $0x198] sm:$0xff] %v973
        %1050 = vst [vmem:[%s188 + $0x1a0] sm:$0xff] %v975
        %1051 = vst [vmem:[%s188 + $0x1a8] sm:$0xff] %v977
        %1052 = vst [vmem:[%s188 + $0x1b0] sm:$0xff] %v979
        %1053 = vst [vmem:[%s188 + $0x1b8] sm:$0xff] %v981
        %1054 = vst [vmem:[%s188 + $0x1c0] sm:$0xff] %v983
        %1055 = vst [vmem:[%s188 + $0x1c8] sm:$0xff] %v985
        %1056 = vst [vmem:[%s188 + $0x1d0] sm:$0xff] %v987
        %1057 = vst [vmem:[%s188 + $0x1d8] sm:$0xff] %v989
        %1058 = vst [vmem:[%s188 + $0x1e0] sm:$0xff] %v991
        %1059 = vst [vmem:[%s188 + $0x1e8] sm:$0xff] %v993
        %1060 = vst [vmem:[%s188 + $0x1f0] sm:$0xff] %v995
        %1061 = vst [vmem:[%s188 + $0x1f8] sm:$0xff] %v997
        %s1062 = sand.u32 %s98, 1
        %s1063 = scalar_lea.sflag [#allocation5], %s1062
        %s1064 = sand.u32 %s98, 1
        %s1065 = smul.addr %s1064, 512
        %s1066 = scalar_lea.vmem [#allocation6], %s1065
        // Predicated region
        $region37: #{tpu_custom_call.1} parent=31 // pred_check
          %p1067 = pneg %p108
        $region38: #{tpu_custom_call.1} parent=31 // pred_check_branch
          %1069 = sbr.rel (%p1067) target = $region40
        $region39: #{tpu_custom_call.1} parent=31 // pred_region
          %s1070 = smul.u32 64, %s22
          %s1072 = ssub.s32 8192, 8192
          %1073 = vsyncadd %s1063, %s1072
          %s1074 = smul.addr %s1070, 128
          %s1075 = scalar_lea.hbm %s3, %s1074
          %s1076 = sshll.u32 %s1066, 4
          %s1077 = int_to_ptr.vmem [resolvable:$true] %s1076
          %1082 = dma.vmem_to_hbm [thread:$0]  %s1077, 8192, %s1075, %s1063, 128, 128, 8
        $region40: #{tpu_custom_call.1} parent=31 // pred_fallthru
          _
      $region32: #{tpu_custom_call.1} parent=5 // pred_fallthru
        _
      %p1083 = scmp.le.s32.totalorder 2, %s17
      // Predicated region
      $region41: #{tpu_custom_call.1} parent=5 // pred_check
        %p1084 = pneg %p1083
      $region42: #{tpu_custom_call.1} parent=5 // pred_check_branch
        %1086 = sbr.rel (%p1084) target = $region44
      $region43: #{tpu_custom_call.1} parent=5 // pred_region
        %s1087 = ssub.s32 %s17, 2
        // Predicated region
        $region45: #{tpu_custom_call.1} parent=43 // pred_check
          %p1088 = pneg %p114
        $region46: #{tpu_custom_call.1} parent=43 // pred_check_branch
          %1090 = sbr.rel (%p1088) target = $region48
        $region47: #{tpu_custom_call.1} parent=43 // pred_region
          %s1091 = sand.u32 %s99, 1
          %s1092 = scalar_lea.sflag [#allocation5], %s1091
          %s1093 = sand.u32 %s99, 1
          %s1094 = smul.addr %s1093, 512
          %s1095 = scalar_lea.vmem [#allocation6], %s1094
          %1096 = dma.done %s1092, 8192
        $region48: #{tpu_custom_call.1} parent=43 // pred_fallthru
          _
      $region44: #{tpu_custom_call.1} parent=5 // pred_fallthru
        _
    $region6: #{tpu_custom_call.1} parent=1 // loop_footer
      %s21 = sadd.s32 1, %s17
    $region7: #{tpu_custom_call.1} parent=1 // loop_footer_branch
      %16 = sbr.rel target = $region3
    $region8: #{tpu_custom_call.1} parent=1 // loop_exit
      _
    %1097 = vsyncpa [#allocation4], 1
    %s1098 = scalar_lea.sflag [#allocation4], 1
    %1099 = vsyncpa %s1098, 1
    %1100 = vsyncpa [#allocation5], 1
    %s1101 = scalar_lea.sflag [#allocation5], 1
    %1102 = vsyncpa %s1101, 1

</llo_original>
